<compile_context>
chip_gen: v5e
topology: v5e:2x2
jax: 0.10.0
libtpu: 0.0.40
codegen_flags: <defaults>
</compile_context>

<pallas_src>
import jax
import jax.numpy as jnp
from jax.experimental import pallas as pl
from jax.experimental.pallas import tpu as pltpu

STATE_DIM = 16
ACTION_DIM = 8
H1 = 400
H2 = 300
OUT = 1

# Lane-padded hidden dims (multiples of 128) -> full vregs in every matmul / ReLU.
# NOTE: keep H2P = 384 (do NOT pad to 512): 384 is 3 exact passes on a 128-wide
# MXU and 256+128 on a 256-wide one; padding further adds 33% real MACs.
H1P = 512
H2P = 384

SPLIT_THRESHOLD = 256  # below this, a second grid step costs more than it saves
MAX_TB = 2048          # max rows per tile when splitting the batch in two
TB_STEP = 1024         # tile size for very large batches (>= 5 grid steps)


def _round_up(x, m):
    return ((x + m - 1) // m) * m


def _choose_tile(batch):
    """Pick the batch tile size (always a multiple of 8)."""
    b8 = _round_up(max(batch, 1), 8)
    if b8 <= SPLIT_THRESHOLD:
        return b8                                   # single tile
    if b8 <= 2 * MAX_TB:
        return _round_up((b8 + 1) // 2, 8)          # exactly two tiles
    return TB_STEP                                  # many ~1k-row tiles


def _critic_kernel(s_ref, a_ref, w1s_ref, w1a_ref, b1_ref, w2_ref, b2_ref,
                   w3_ref, b3_ref, o_ref):
    # Layer 1: the torch.cat is fused by splitting w1 -> two small MXU pushes.
    # Inputs are cast to bf16 on the VPU (cheap); accumulation stays f32.
    s = s_ref[...].astype(jnp.bfloat16)
    a = a_ref[...].astype(jnp.bfloat16)
    h1 = (jnp.dot(s, w1s_ref[...], preferred_element_type=jnp.float32)
          + jnp.dot(a, w1a_ref[...], preferred_element_type=jnp.float32)
          + b1_ref[...])
    h1 = jnp.maximum(h1, 0.0).astype(jnp.bfloat16)                # (TB, 512) bf16

    # Layer 2: (TB,512) @ (512,384) bf16 on the MXU, f32 accumulate.
    h2 = jnp.dot(h1, w2_ref[...], preferred_element_type=jnp.float32) + b2_ref[...]
    h2 = jnp.maximum(h2, 0.0)                                     # (TB, 384) f32

    # Layer 3 (N=1): degenerate matmul -> VPU multiply + XLU lane reduction
    # instead of filling 1 of 128/256 MXU result columns.  b3 is an SMEM scalar.
    out = jnp.sum(h2 * w3_ref[...], axis=-1, keepdims=True) + b3_ref[0, 0]
    o_ref[...] = out.astype(o_ref.dtype)                          # (TB, 1)


def prepare_params(params):
    """One-time param prep: split w1 (fuses the concat), zero-pad hidden dims to
    lane multiples (exact: padded bias entries are 0, ReLU(0)=0, and the
    corresponding w2 rows / w3 entries are 0), and cast the MXU weights to bf16
    (biases / final weight row stay f32; all accumulation is f32)."""
    w1, b1, w2, b2, w3, b3 = params            # w stored (in, out), b stored (1, out)
    w1s = jnp.pad(w1[:STATE_DIM], ((0, 0), (0, H1P - H1))).astype(jnp.bfloat16)   # (16, 512)
    w1a = jnp.pad(w1[STATE_DIM:], ((0, 0), (0, H1P - H1))).astype(jnp.bfloat16)   # (8, 512)
    b1p = jnp.pad(b1, ((0, 0), (0, H1P - H1)))                                    # (1, 512) f32
    w2p = jnp.pad(w2, ((0, H1P - H1), (0, H2P - H2))).astype(jnp.bfloat16)        # (512, 384)
    b2p = jnp.pad(b2, ((0, 0), (0, H2P - H2)))                                    # (1, 384) f32
    w3r = jnp.pad(w3.reshape(1, H2), ((0, 0), (0, H2P - H2)))                     # (1, 384) f32
    b3p = b3.reshape(1, 1)                                                        # (1, 1)  f32 (SMEM)
    return (w1s, w1a, b1p, w2p, b2p, w3r, b3p)


@jax.jit
def critic_forward(state, action, prepared_params):
    """state: (B, STATE_DIM), action: (B, ACTION_DIM) -> (B, 1)"""
    w1s, w1a, b1, w2, b2, w3, b3 = prepared_params
    state = state.astype(jnp.float32)
    action = action.astype(jnp.float32)
    B = state.shape[0]

    tb = _choose_tile(B)
    grid = (pl.cdiv(B, tb),)   # ragged last tile handled by Pallas (masked write)

    # TODO(synk): weights/biases use a constant index_map so they are not
    # re-DMA'd across grid steps, but they are still double-buffered;
    # pipeline_mode=pl.Buffered(1) on their specs would trim ~0.5 MiB of VMEM.
    # TODO(synk): on v7x, pltpu.CORE_PARALLEL (or pl.core_map) on the batch axis
    # is what actually shards the >=2 grid steps across the two TensorCores.
    # TODO(synk): a lane-dense (1, tb) output layout (batch on lanes) would avoid
    # masked vst.msk partial stores; only worth it if profiling shows store slack.
    out = pl.pallas_call(
        _critic_kernel,
        out_shape=jax.ShapeDtypeStruct((B, OUT), jnp.float32),
        grid_spec=pltpu.PrefetchScalarGridSpec(
            num_scalar_prefetch=0,
            grid=grid,
            in_specs=[
                pl.BlockSpec((tb, STATE_DIM), lambda i: (i, 0)),    # state tile
                pl.BlockSpec((tb, ACTION_DIM), lambda i: (i, 0)),   # action tile
                pl.BlockSpec((STATE_DIM, H1P), lambda i: (0, 0)),   # w1_state (resident)
                pl.BlockSpec((ACTION_DIM, H1P), lambda i: (0, 0)),  # w1_action
                pl.BlockSpec((1, H1P), lambda i: (0, 0)),           # b1
                pl.BlockSpec((H1P, H2P), lambda i: (0, 0)),         # w2
                pl.BlockSpec((1, H2P), lambda i: (0, 0)),           # b2
                pl.BlockSpec((1, H2P), lambda i: (0, 0)),           # w3 row
                pl.BlockSpec(memory_space=pltpu.MemorySpace.SMEM),  # b3 scalar
            ],
            out_specs=pl.BlockSpec((tb, OUT), lambda i: (i, 0)),
        ),
        compiler_params=pltpu.CompilerParams(
            dimension_semantics=("parallel",),
            # Big batch tiles (up to ~2048 rows of f32/bf16 activations) need
            # more than v5e's 16 MiB default scoped-VMEM limit; 64 MiB is safe
            # on every chip and far above actual usage (~10-20 MiB at TB=2048).
            vmem_limit_bytes=64 * 1024 * 1024,
        ),
    )(state, action, w1s, w1a, b1, w2, b2, w3, b3)

    return out


def init_params(key):
    """Deterministic init mimicking PyTorch's default Linear init (U[-1/sqrt(fan_in), +1/sqrt(fan_in)])."""
    def linear(key, fan_in, fan_out):
        kw, kb = jax.random.split(key)
        bound = 1.0 / jnp.sqrt(fan_in)
        w = jax.random.uniform(kw, (fan_in, fan_out), jnp.float32, -bound, bound)
        b = jax.random.uniform(kb, (1, fan_out), jnp.float32, -bound, bound)
        return w, b

    k1, k2, k3 = jax.random.split(key, 3)
    w1, b1 = linear(k1, STATE_DIM + ACTION_DIM, H1)
    w2, b2 = linear(k2, H1, H2)
    w3, b3 = linear(k3, H2, OUT)
    return (w1, b1, w2, b2, w3, b3)


def critic_ref(state, action, params):
    """Pure-JAX f32 reference of the PyTorch forward pass (HIGHEST precision)."""
    w1, b1, w2, b2, w3, b3 = params
    hp = jax.lax.Precision.HIGHEST
    x = jnp.concatenate([state, action], axis=1)
    h1 = jnp.maximum(jnp.dot(x, w1, precision=hp) + b1, 0.0)
    h2 = jnp.maximum(jnp.dot(h1, w2, precision=hp) + b2, 0.0)
    return jnp.dot(h2, w3, precision=hp) + b3


if __name__ == "__main__":
    key = jax.random.PRNGKey(0)
    k_params, k_state, k_action = jax.random.split(key, 3)

    params = init_params(k_params)
    prepped = prepare_params(params)

    # bf16 MXU operands (f32 accumulate) vs. a true-f32 reference: tolerance is
    # set for bf16-class matmul error, which is also what the previous
    # default-precision f32 dots delivered.
    ATOL, RTOL = 5e-3, 2e-2

    # Small-shape check (single tile, ragged block: 2 rows in an 8-row tile).
    B = 2
    state = jax.random.normal(k_state, (B, STATE_DIM), jnp.float32)
    action = jax.random.normal(k_action, (B, ACTION_DIM), jnp.float32)
    out = jax.block_until_ready(critic_forward(state, action, prepped))
    ref = critic_ref(state, action, params)
    assert out.shape == (B, 1), out.shape
    assert jnp.allclose(out, ref, atol=ATOL, rtol=RTOL), (out, ref)

    # Multi-tile path (two tiles of 304 rows, ragged second tile).
    B2 = 600
    state2 = jax.random.normal(k_state, (B2, STATE_DIM), jnp.float32)
    action2 = jax.random.normal(k_action, (B2, ACTION_DIM), jnp.float32)
    out2 = jax.block_until_ready(critic_forward(state2, action2, prepped))
    ref2 = critic_ref(state2, action2, params)
    assert out2.shape == (B2, 1), out2.shape
    assert jnp.allclose(out2, ref2, atol=ATOL, rtol=RTOL)

    print("KERNEL_OK")
</pallas_src>

<mosaic_0001>
module attributes {stable_mosaic.version = 11 : i64} {
  func.func @_critic_kernel(%arg0: i32, %arg1: memref<8x16xf32, #tpu.memory_space<vmem>>, %arg2: memref<8x8xf32, #tpu.memory_space<vmem>>, %arg3: memref<16x512xbf16, #tpu.memory_space<vmem>>, %arg4: memref<8x512xbf16, #tpu.memory_space<vmem>>, %arg5: memref<1x512xf32, #tpu.memory_space<vmem>>, %arg6: memref<512x384xbf16, #tpu.memory_space<vmem>>, %arg7: memref<1x384xf32, #tpu.memory_space<vmem>>, %arg8: memref<1x384xf32, #tpu.memory_space<vmem>>, %arg9: memref<1x1xf32, #tpu.memory_space<smem>>, %arg10: memref<8x1xf32, #tpu.memory_space<vmem>>) attributes {dimension_semantics = [#tpu.dimension_semantics<parallel>], iteration_bounds = array<i64: 1>, scalar_prefetch = 0 : i64, scratch_operands = 0 : i64, tpu.core_type = #tpu.core_type<tc>, window_params = [{transform_indices = @transform_0, window_bounds = array<i64: 8, 16>}, {transform_indices = @transform_1, window_bounds = array<i64: 8, 8>}, {pipeline_mode = #tpu.pipeline_mode<synchronous>, transform_indices = @transform_2, window_bounds = array<i64: 16, 512>}, {pipeline_mode = #tpu.pipeline_mode<synchronous>, transform_indices = @transform_3, window_bounds = array<i64: 8, 512>}, {pipeline_mode = #tpu.pipeline_mode<synchronous>, transform_indices = @transform_4, window_bounds = array<i64: 1, 512>}, {pipeline_mode = #tpu.pipeline_mode<synchronous>, transform_indices = @transform_5, window_bounds = array<i64: 512, 384>}, {pipeline_mode = #tpu.pipeline_mode<synchronous>, transform_indices = @transform_6, window_bounds = array<i64: 1, 384>}, {pipeline_mode = #tpu.pipeline_mode<synchronous>, transform_indices = @transform_7, window_bounds = array<i64: 1, 384>}, {transform_indices = @transform_8, window_bounds = array<i64: 1, 1>}, {transform_indices = @transform_9, window_bounds = array<i64: 8, 1>}]} {
    %c0 = arith.constant 0 : index
    %c0_0 = arith.constant 0 : index
    %0 = vector.load %arg1[%c0, %c0_0] : memref<8x16xf32, #tpu.memory_space<vmem>>, vector<8x16xf32>
    %1 = arith.truncf %0 : vector<8x16xf32> to vector<8x16xbf16>
    %c0_1 = arith.constant 0 : index
    %c0_2 = arith.constant 0 : index
    %2 = vector.load %arg2[%c0_1, %c0_2] : memref<8x8xf32, #tpu.memory_space<vmem>>, vector<8x8xf32>
    %3 = arith.truncf %2 : vector<8x8xf32> to vector<8x8xbf16>
    %c0_3 = arith.constant 0 : index
    %c0_4 = arith.constant 0 : index
    %4 = vector.load %arg3[%c0_3, %c0_4] : memref<16x512xbf16, #tpu.memory_space<vmem>>, vector<16x512xbf16>
    %cst = arith.constant dense<0.000000e+00> : vector<8x512xf32>
    %5 = tpu.matmul %1, %4, %cst {dimension_numbers = #tpu.dot_dimension_numbers<[1], [0], [0], [1], [0, 0, 1, 1], [], []>} : vector<8x16xbf16>, vector<16x512xbf16>, vector<8x512xf32> -> vector<8x512xf32>
    %c0_5 = arith.constant 0 : index
    %c0_6 = arith.constant 0 : index
    %6 = vector.load %arg4[%c0_5, %c0_6] : memref<8x512xbf16, #tpu.memory_space<vmem>>, vector<8x512xbf16>
    %cst_7 = arith.constant dense<0.000000e+00> : vector<8x512xf32>
    %7 = tpu.matmul %3, %6, %cst_7 {dimension_numbers = #tpu.dot_dimension_numbers<[1], [0], [0], [1], [0, 0, 1, 1], [], []>} : vector<8x8xbf16>, vector<8x512xbf16>, vector<8x512xf32> -> vector<8x512xf32>
    %8 = arith.addf %5, %7 : vector<8x512xf32>
    %c0_8 = arith.constant 0 : index
    %c0_9 = arith.constant 0 : index
    %9 = vector.load %arg5[%c0_8, %c0_9] : memref<1x512xf32, #tpu.memory_space<vmem>>, vector<1x512xf32>
    %10 = vector.broadcast %9 : vector<1x512xf32> to vector<8x512xf32>
    %11 = arith.addf %8, %10 : vector<8x512xf32>
    %cst_10 = arith.constant 0.000000e+00 : f32
    %12 = vector.broadcast %cst_10 : f32 to vector<8x512xf32>
    %13 = arith.maximumf %11, %12 : vector<8x512xf32>
    %14 = arith.truncf %13 : vector<8x512xf32> to vector<8x512xbf16>
    %c0_11 = arith.constant 0 : index
    %c0_12 = arith.constant 0 : index
    %15 = vector.load %arg6[%c0_11, %c0_12] : memref<512x384xbf16, #tpu.memory_space<vmem>>, vector<512x384xbf16>
    %cst_13 = arith.constant dense<0.000000e+00> : vector<8x384xf32>
    %16 = tpu.matmul %14, %15, %cst_13 {dimension_numbers = #tpu.dot_dimension_numbers<[1], [0], [0], [1], [0, 0, 1, 1], [], []>} : vector<8x512xbf16>, vector<512x384xbf16>, vector<8x384xf32> -> vector<8x384xf32>
    %c0_14 = arith.constant 0 : index
    %c0_15 = arith.constant 0 : index
    %17 = vector.load %arg7[%c0_14, %c0_15] : memref<1x384xf32, #tpu.memory_space<vmem>>, vector<1x384xf32>
    %18 = vector.broadcast %17 : vector<1x384xf32> to vector<8x384xf32>
    %19 = arith.addf %16, %18 : vector<8x384xf32>
    %cst_16 = arith.constant 0.000000e+00 : f32
    %20 = vector.broadcast %cst_16 : f32 to vector<8x384xf32>
    %21 = arith.maximumf %19, %20 : vector<8x384xf32>
    %c0_17 = arith.constant 0 : index
    %c0_18 = arith.constant 0 : index
    %22 = vector.load %arg8[%c0_17, %c0_18] : memref<1x384xf32, #tpu.memory_space<vmem>>, vector<1x384xf32>
    %23 = vector.broadcast %22 : vector<1x384xf32> to vector<8x384xf32>
    %24 = arith.mulf %21, %23 : vector<8x384xf32>
    %cst_19 = arith.constant dense<0.000000e+00> : vector<8xf32>
    %25 = vector.multi_reduction <add>, %24, %cst_19 [1] : vector<8x384xf32> to vector<8xf32>
    %26 = vector.shape_cast %25 : vector<8xf32> to vector<8x1xf32>
    %c0_20 = arith.constant 0 : index
    %c0_21 = arith.constant 0 : index
    %27 = memref.load %arg9[%c0_20, %c0_21] : memref<1x1xf32, #tpu.memory_space<smem>>
    %28 = vector.broadcast %27 : f32 to vector<8x1xf32>
    %29 = arith.addf %26, %28 : vector<8x1xf32>
    %c0_22 = arith.constant 0 : index
    %c0_23 = arith.constant 0 : index
    %30 = vector.load %arg10[%c0_22, %c0_23] : memref<8x1xf32, #tpu.memory_space<vmem>>, vector<8x1xf32>
    tpu.vector_store %arg10[%c0_22, %c0_23], %29 {strides = array<i32>} : memref<8x1xf32, #tpu.memory_space<vmem>>, vector<8x1xf32>,
    return
  }
  func.func @transform_0(%arg0: i32) -> (i32, i32) {
    %c0_i32 = arith.constant 0 : i32
    %c0_i32_0 = arith.constant 0 : i32
    return %arg0, %c0_i32 : i32, i32
  }
  func.func @transform_1(%arg0: i32) -> (i32, i32) {
    %c0_i32 = arith.constant 0 : i32
    %c0_i32_0 = arith.constant 0 : i32
    return %arg0, %c0_i32 : i32, i32
  }
  func.func @transform_2(%arg0: i32) -> (i32, i32) {
    %c0_i32 = arith.constant 0 : i32
    %c0_i32_0 = arith.constant 0 : i32
    %c0_i32_1 = arith.constant 0 : i32
    return %c0_i32, %c0_i32_0 : i32, i32
  }
  func.func @transform_3(%arg0: i32) -> (i32, i32) {
    %c0_i32 = arith.constant 0 : i32
    %c0_i32_0 = arith.constant 0 : i32
    %c0_i32_1 = arith.constant 0 : i32
    return %c0_i32, %c0_i32_0 : i32, i32
  }
  func.func @transform_4(%arg0: i32) -> (i32, i32) {
    %c0_i32 = arith.constant 0 : i32
    %c0_i32_0 = arith.constant 0 : i32
    %c0_i32_1 = arith.constant 0 : i32
    return %c0_i32, %c0_i32_0 : i32, i32
  }
  func.func @transform_5(%arg0: i32) -> (i32, i32) {
    %c0_i32 = arith.constant 0 : i32
    %c0_i32_0 = arith.constant 0 : i32
    %c0_i32_1 = arith.constant 0 : i32
    return %c0_i32, %c0_i32_0 : i32, i32
  }
  func.func @transform_6(%arg0: i32) -> (i32, i32) {
    %c0_i32 = arith.constant 0 : i32
    %c0_i32_0 = arith.constant 0 : i32
    %c0_i32_1 = arith.constant 0 : i32
    return %c0_i32, %c0_i32_0 : i32, i32
  }
  func.func @transform_7(%arg0: i32) -> (i32, i32) {
    %c0_i32 = arith.constant 0 : i32
    %c0_i32_0 = arith.constant 0 : i32
    %c0_i32_1 = arith.constant 0 : i32
    return %c0_i32, %c0_i32_0 : i32, i32
  }
  func.func @transform_8(%arg0: i32) -> (i32, i32) {
    %c0_i32 = arith.constant 0 : i32
    %c0_i32_0 = arith.constant 0 : i32
    %c0_i32_1 = arith.constant 0 : i32
    return %c0_i32, %c0_i32_0 : i32, i32
  }
  func.func @transform_9(%arg0: i32) -> (i32, i32) {
    %c0_i32 = arith.constant 0 : i32
    %c0_i32_0 = arith.constant 0 : i32
    return %arg0, %c0_i32 : i32, i32
  }
}

</mosaic_0001>

<llo_original>
// kernel: critic_forward.1
$region0: #{critic_forward.1}
  #allocation0 [shape = 'u32[]', space=smem, size = 0x4, offset = 0x4, fixed_abs, tag = 'smem constant byte address 0x4 - core index']
  #allocation1 [shape = 'u32[72,128]{1,0:T(1,128)}', space=vmem, size = 0x9000, scoped, tag = 'internal scratch']
  #allocation2 [shape = 'f32[1,1]{1,0:T(1,128)S(6)}', space=smem, size = 0x200, scoped, tag = 'scoped memory for critic_forward.1']
  %s0 = inlined_call_operand.hbm [shape: f32[2,16], index: 0, kind: input, shape index: {}]
  %s1 = inlined_call_operand.hbm [shape: f32[2,8], index: 1, kind: input, shape index: {}]
  %s2 = inlined_call_operand.hbm [shape: bf16[16,512], index: 2, kind: input, shape index: {}]
  %s3 = inlined_call_operand.hbm [shape: bf16[8,512], index: 3, kind: input, shape index: {}]
  %s4 = inlined_call_operand.vmem [shape: f32[1,512], index: 4, kind: input, shape index: {}]
  %s5 = inlined_call_operand.hbm [shape: bf16[512,384], index: 5, kind: input, shape index: {}]
  %s6 = inlined_call_operand.vmem [shape: f32[1,384], index: 6, kind: input, shape index: {}]
  %s7 = inlined_call_operand.hbm [shape: f32[1,384], index: 7, kind: input, shape index: {}]
  %s8 = inlined_call_operand.<no memory space> [shape: f32[1,1], index: 8, kind: input, shape index: {}]
  %s9 = inlined_call_operand.vmem [shape: f32[2,1], index: 9, kind: output, shape index: {}]
  %s10 = sld [smem:[#allocation0]]
  $region100: #{critic_forward.1} parent=0
    _
  %s12 = ssub.s32 1, %s10
  %s13 = scalar_select 0, %s12, %s10
  %14 = sst [smem:[#allocation2]] %s8
  $region1: #{critic_forward.1} parent=0
    #allocation3 [shape = 'u8[4096]{0}', space=vmem, size = 0x1000, scoped, tag = 'input window, operand 0, single buffered']
    #allocation4 [shape = 's32[1]{0}', space=sflag, size = 0x4, scoped, tag = 'scoped memory for critic_forward.1']
    #allocation5 [shape = 'u8[4096]{0}', space=vmem, size = 0x1000, scoped, tag = 'input window, operand 1, single buffered']
    #allocation6 [shape = 's32[1]{0}', space=sflag, size = 0x4, scoped, tag = 'scoped memory for critic_forward.1']
    #allocation7 [shape = 'u8[16384]{0}', space=vmem, size = 0x4000, scoped, tag = 'input window, operand 2, single buffered']
    #allocation8 [shape = 'u8[8192]{0}', space=vmem, size = 0x2000, scoped, tag = 'input window, operand 3, single buffered']
    #allocation9 [shape = 's32[1]{0}', space=sflag, size = 0x4, scoped, tag = 'scoped memory for critic_forward.1']
    #allocation10 [shape = 'u8[393216]{0}', space=vmem, size = 0x60000, scoped, tag = 'input window, operand 5, single buffered']
    #allocation11 [shape = 'u8[1536]{0}', space=vmem, size = 0x800, scoped, tag = 'input window, operand 7, single buffered']
    #allocation12 [shape = 's32[1]{0}', space=sflag, size = 0x4, scoped, tag = 'scoped memory for critic_forward.1']
    #allocation13 [shape = 'u8[4096]{0}', space=vmem, size = 0x1000, scoped, tag = 'output window, operand 0, single buffered']
    %15 = vsyncpa [#allocation4], 0
    %16 = vsyncpa [#allocation6], 0
    %17 = vsyncpa [#allocation9], 0
    %18 = vsyncpa [#allocation12], 0
    // Predicated region
    $region2: #{critic_forward.1} parent=1 // pred_check
      _
    $region3: #{critic_forward.1} parent=1 // pred_check_branch
      %20 = sbr.rel (0) target = $region5
    $region4: #{critic_forward.1} parent=1 // pred_region
      %22 = vsyncadd [#allocation4], 96
      %s23 = sshll.u32 %s0, 4
      %s24 = int_to_ptr.hbm [resolvable:$true] %s23
      %s25 = sshll.u32 [#allocation3], 4
      %s26 = int_to_ptr.vmem [resolvable:$true] %s25
      %31 = dma.hbm_to_vmem [thread:$0]  %s24, 32, %s26, [#allocation4], 32, 32, 2
    $region5: #{critic_forward.1} parent=1 // pred_fallthru
      _
    // Predicated region
    $region6: #{critic_forward.1} parent=1 // pred_check
      _
    $region7: #{critic_forward.1} parent=1 // pred_check_branch
      %33 = sbr.rel (0) target = $region9
    $region8: #{critic_forward.1} parent=1 // pred_region
      %35 = vsyncadd [#allocation6], 96
      %s36 = sshll.u32 %s1, 4
      %s37 = int_to_ptr.hbm [resolvable:$true] %s36
      %s38 = sshll.u32 [#allocation5], 4
      %s39 = int_to_ptr.vmem [resolvable:$true] %s38
      %44 = dma.hbm_to_vmem [thread:$0]  %s37, 32, %s39, [#allocation6], 32, 32, 2
    $region9: #{critic_forward.1} parent=1 // pred_fallthru
      _
    // Predicated region
    $region10: #{critic_forward.1} parent=1 // pred_check
      _
    $region11: #{critic_forward.1} parent=1 // pred_check_branch
      %46 = sbr.rel (0) target = $region13
    $region12: #{critic_forward.1} parent=1 // pred_region
      %48 = vsyncadd [#allocation6], 0
      %s49 = sshll.u32 %s2, 4
      %s50 = int_to_ptr.hbm [resolvable:$true] %s49
      %s51 = sshll.u32 [#allocation7], 4
      %s52 = int_to_ptr.vmem [resolvable:$true] %s51
      %57 = dma.hbm_to_vmem [thread:$0]  %s50, 512, %s52, [#allocation6], 256, 256, 16
    $region13: #{critic_forward.1} parent=1 // pred_fallthru
      _
    // Predicated region
    $region14: #{critic_forward.1} parent=1 // pred_check
      _
    $region15: #{critic_forward.1} parent=1 // pred_check_branch
      %59 = sbr.rel (0) target = $region17
    $region16: #{critic_forward.1} parent=1 // pred_region
      %61 = vsyncadd [#allocation9], 0
      %s63 = sshll.u32 %s3, 4
      %s64 = int_to_ptr.hbm [resolvable:$true] %s63
      %s65 = sshll.u32 [#allocation8], 4
      %s66 = int_to_ptr.vmem [resolvable:$true] %s65
      %68 = dma.hbm_to_vmem [thread:$0]  %s64, 256, %s66, [#allocation9]
    $region17: #{critic_forward.1} parent=1 // pred_fallthru
      _
    // Predicated region
    $region18: #{critic_forward.1} parent=1 // pred_check
      _
    $region19: #{critic_forward.1} parent=1 // pred_check_branch
      %70 = sbr.rel (0) target = $region21
    $region20: #{critic_forward.1} parent=1 // pred_region
      _
    $region21: #{critic_forward.1} parent=1 // pred_fallthru
      _
    // Predicated region
    $region22: #{critic_forward.1} parent=1 // pred_check
      _
    $region23: #{critic_forward.1} parent=1 // pred_check_branch
      %72 = sbr.rel (0) target = $region25
    $region24: #{critic_forward.1} parent=1 // pred_region
      %74 = vsyncadd [#allocation9], 0
      %s75 = sshll.u32 %s5, 4
      %s76 = int_to_ptr.hbm [resolvable:$true] %s75
      %s77 = sshll.u32 [#allocation10], 4
      %s78 = int_to_ptr.vmem [resolvable:$true] %s77
      %83 = dma.hbm_to_vmem [thread:$0]  %s76, 12288, %s78, [#allocation9], 192, 192, 12
    $region25: #{critic_forward.1} parent=1 // pred_fallthru
      _
    // Predicated region
    $region26: #{critic_forward.1} parent=1 // pred_check
      _
    $region27: #{critic_forward.1} parent=1 // pred_check_branch
      %85 = sbr.rel (0) target = $region29
    $region28: #{critic_forward.1} parent=1 // pred_region
      _
    $region29: #{critic_forward.1} parent=1 // pred_fallthru
      _
    // Predicated region
    $region30: #{critic_forward.1} parent=1 // pred_check
      _
    $region31: #{critic_forward.1} parent=1 // pred_check_branch
      %87 = sbr.rel (0) target = $region33
    $region32: #{critic_forward.1} parent=1 // pred_region
      %89 = vsyncadd [#allocation12], 0
      %s91 = sshll.u32 %s7, 4
      %s92 = int_to_ptr.hbm [resolvable:$true] %s91
      %s93 = sshll.u32 [#allocation11], 4
      %s94 = int_to_ptr.vmem [resolvable:$true] %s93
      %96 = dma.hbm_to_vmem [thread:$0]  %s92, 48, %s94, [#allocation12]
    $region33: #{critic_forward.1} parent=1 // pred_fallthru
      _
    // Predicated region
    $region34: #{critic_forward.1} parent=1 // pred_check
      _
    $region35: #{critic_forward.1} parent=1 // pred_check_branch
      %98 = sbr.rel (0) target = $region37
    $region36: #{critic_forward.1} parent=1 // pred_region
      _
    $region37: #{critic_forward.1} parent=1 // pred_fallthru
      _
    // Predicated region
    $region38: #{critic_forward.1} parent=1 // pred_check
      _
    $region39: #{critic_forward.1} parent=1 // pred_check_branch
      %100 = sbr.rel (0) target = $region41
    $region40: #{critic_forward.1} parent=1 // pred_region
      %102 = dma.done [#allocation4], 128
    $region41: #{critic_forward.1} parent=1 // pred_fallthru
      _
    // Predicated region
    $region42: #{critic_forward.1} parent=1 // pred_check
      _
    $region43: #{critic_forward.1} parent=1 // pred_check_branch
      %104 = sbr.rel (0) target = $region45
    $region44: #{critic_forward.1} parent=1 // pred_region
      %106 = dma.done [#allocation6], 128
    $region45: #{critic_forward.1} parent=1 // pred_fallthru
      _
    // Predicated region
    $region46: #{critic_forward.1} parent=1 // pred_check
      _
    $region47: #{critic_forward.1} parent=1 // pred_check_branch
      %108 = sbr.rel (0) target = $region49
    $region48: #{critic_forward.1} parent=1 // pred_region
      %110 = dma.done [#allocation6], 512
    $region49: #{critic_forward.1} parent=1 // pred_fallthru
      _
    // Predicated region
    $region50: #{critic_forward.1} parent=1 // pred_check
      _
    $region51: #{critic_forward.1} parent=1 // pred_check_branch
      %112 = sbr.rel (0) target = $region53
    $region52: #{critic_forward.1} parent=1 // pred_region
      %114 = dma.done [#allocation9], 256
    $region53: #{critic_forward.1} parent=1 // pred_fallthru
      _
    // Predicated region
    $region54: #{critic_forward.1} parent=1 // pred_check
      _
    $region55: #{critic_forward.1} parent=1 // pred_check_branch
      %116 = sbr.rel (0) target = $region57
    $region56: #{critic_forward.1} parent=1 // pred_region
      %118 = dma.done [#allocation9], 12288
    $region57: #{critic_forward.1} parent=1 // pred_fallthru
      _
    // Predicated region
    $region58: #{critic_forward.1} parent=1 // pred_check
      _
    $region59: #{critic_forward.1} parent=1 // pred_check_branch
      %120 = sbr.rel (0) target = $region61
    $region60: #{critic_forward.1} parent=1 // pred_region
      %122 = dma.done [#allocation12], 48
    $region61: #{critic_forward.1} parent=1 // pred_fallthru
      _
    %v124 = vld [vmem:[#allocation3] sm:$0xff]
    %v125 = vpack.c.bf16 %v124, %v124
    %v126 = vld [vmem:[#allocation5] sm:$0xff]
    %v127 = vpack.c.bf16 %v126, %v126
    %v128 = vld [vmem:[#allocation7] sm:$0xff]
    %v129 = vld [vmem:[#allocation7 + $0x8] sm:$0xff]
    %v130 = vld [vmem:[#allocation7 + $0x10] sm:$0xff]
    %v131 = vld [vmem:[#allocation7 + $0x18] sm:$0xff]
    %v132 = vld [vmem:[#allocation8] sm:$0xff]
    %v133 = vld [vmem:[#allocation8 + $0x8] sm:$0xff]
    %v136 = vunpack.c.l.b16 %v132
    %v137 = vunpack.c.h.b16 %v132
    %v138 = vunpack.c.l.b16 %v133
    %v139 = vunpack.c.h.b16 %v133
    %v140 = vpack.c.b16 %v136, %v136
    %v141 = vpack.c.b16 %v137, %v137
    %v142 = vpack.c.b16 %v138, %v138
    %v143 = vpack.c.b16 %v139, %v139
    %vm144 = vcmask 64512
    %v146 = vsel %vm144, %v127, 0
    %vm148 = vcmask 1043456
    %v150 = vsel %vm148, %v140, 0
    %v153 = vsel %vm148, %v141, 0
    %v156 = vsel %vm148, %v142, 0
    %v159 = vsel %vm148, %v143, 0
    %161 = vmatpush.bf16.msra.mxu0 0
    %162 = vmatpush.bf16.msra.mxu0 0
    %163 = vmatpush.bf16.msra.mxu0 0
    %164 = vmatpush.bf16.msra.mxu0 0
    %165 = vmatpush.bf16.msra.mxu0 0
    %166 = vmatpush.bf16.msra.mxu0 0
    %167 = vmatpush.bf16.msra.mxu0 0
    %168 = vmatpush.bf16.msra.mxu0 %v150
    %169 = vmatmul.bf16.gmra.mxu0 %v146
    %v170 = vpop.f32.mrf.mxu0
    %v171 = vadd.f32 0.0, %v170
    %v172 = vpop.f32.mrf.mxu0
    %173 = vdwg.mxu0
    %174 = vmatpush.bf16.msra.mxu0 0
    %175 = vmatpush.bf16.msra.mxu0 0
    %176 = vmatpush.bf16.msra.mxu0 0
    %177 = vmatpush.bf16.msra.mxu0 0
    %178 = vmatpush.bf16.msra.mxu0 0
    %179 = vmatpush.bf16.msra.mxu0 0
    %180 = vmatpush.bf16.msra.mxu0 0
    %181 = vmatpush.bf16.msra.mxu0 %v153
    %182 = vmatmul.bf16.gmra.mxu0 %v146
    %v183 = vpop.f32.mrf.mxu0
    %v184 = vadd.f32 0.0, %v183
    %v185 = vpop.f32.mrf.mxu0
    %186 = vdwg.mxu0
    %187 = vmatpush.bf16.msra.mxu0 0
    %188 = vmatpush.bf16.msra.mxu0 0
    %189 = vmatpush.bf16.msra.mxu0 0
    %190 = vmatpush.bf16.msra.mxu0 0
    %191 = vmatpush.bf16.msra.mxu0 0
    %192 = vmatpush.bf16.msra.mxu0 0
    %193 = vmatpush.bf16.msra.mxu0 0
    %194 = vmatpush.bf16.msra.mxu0 %v156
    %195 = vmatmul.bf16.gmra.mxu0 %v146
    %v196 = vpop.f32.mrf.mxu0
    %v197 = vadd.f32 0.0, %v196
    %v198 = vpop.f32.mrf.mxu0
    %199 = vdwg.mxu0
    %200 = vmatpush.bf16.msra.mxu0 0
    %201 = vmatpush.bf16.msra.mxu0 0
    %202 = vmatpush.bf16.msra.mxu0 0
    %203 = vmatpush.bf16.msra.mxu0 0
    %204 = vmatpush.bf16.msra.mxu0 0
    %205 = vmatpush.bf16.msra.mxu0 0
    %206 = vmatpush.bf16.msra.mxu0 0
    %207 = vmatpush.bf16.msra.mxu0 %v159
    %208 = vmatmul.bf16.gmra.mxu0 %v146
    %v209 = vpop.f32.mrf.mxu0
    %v210 = vadd.f32 0.0, %v209
    %v211 = vpop.f32.mrf.mxu0
    %212 = vdwg.mxu0
    %v217 = vunpack.c.l.b16 %v128
    %v218 = vunpack.c.h.b16 %v128
    %v219 = vunpack.c.l.b16 %v129
    %v220 = vunpack.c.h.b16 %v129
    %v221 = vunpack.c.l.b16 %v130
    %v222 = vunpack.c.h.b16 %v130
    %v223 = vunpack.c.l.b16 %v131
    %v224 = vunpack.c.h.b16 %v131
    %v225 = vpack.c.b16 %v221, %v217
    %v226 = vpack.c.b16 %v222, %v218
    %v227 = vpack.c.b16 %v223, %v219
    %v228 = vpack.c.b16 %v224, %v220
    %vm233 = vcmask 130048
    %v235 = vsel %vm233, %v125, 0
    %237 = vmatpush.bf16.msra.mxu0 0
    %238 = vmatpush.bf16.msra.mxu0 0
    %239 = vmatpush.bf16.msra.mxu0 0
    %240 = vmatpush.bf16.msra.mxu0 0
    %241 = vmatpush.bf16.msra.mxu0 0
    %242 = vmatpush.bf16.msra.mxu0 0
    %243 = vmatpush.bf16.msra.mxu0 0
    %244 = vmatpush.bf16.msra.mxu0 %v225
    %245 = vmatmul.bf16.gmra.mxu0 %v235
    %v246 = vpop.f32.mrf.mxu0
    %v247 = vadd.f32 %v171, %v246
    %v248 = vpop.f32.mrf.mxu0
    %249 = vdwg.mxu0
    %250 = vmatpush.bf16.msra.mxu0 0
    %251 = vmatpush.bf16.msra.mxu0 0
    %252 = vmatpush.bf16.msra.mxu0 0
    %253 = vmatpush.bf16.msra.mxu0 0
    %254 = vmatpush.bf16.msra.mxu0 0
    %255 = vmatpush.bf16.msra.mxu0 0
    %256 = vmatpush.bf16.msra.mxu0 0
    %257 = vmatpush.bf16.msra.mxu0 %v226
    %258 = vmatmul.bf16.gmra.mxu0 %v235
    %v259 = vpop.f32.mrf.mxu0
    %v260 = vadd.f32 %v184, %v259
    %v261 = vpop.f32.mrf.mxu0
    %262 = vdwg.mxu0
    %263 = vmatpush.bf16.msra.mxu0 0
    %264 = vmatpush.bf16.msra.mxu0 0
    %265 = vmatpush.bf16.msra.mxu0 0
    %266 = vmatpush.bf16.msra.mxu0 0
    %267 = vmatpush.bf16.msra.mxu0 0
    %268 = vmatpush.bf16.msra.mxu0 0
    %269 = vmatpush.bf16.msra.mxu0 0
    %270 = vmatpush.bf16.msra.mxu0 %v227
    %271 = vmatmul.bf16.gmra.mxu0 %v235
    %v272 = vpop.f32.mrf.mxu0
    %v273 = vadd.f32 %v197, %v272
    %v274 = vpop.f32.mrf.mxu0
    %275 = vdwg.mxu0
    %276 = vmatpush.bf16.msra.mxu0 0
    %277 = vmatpush.bf16.msra.mxu0 0
    %278 = vmatpush.bf16.msra.mxu0 0
    %279 = vmatpush.bf16.msra.mxu0 0
    %280 = vmatpush.bf16.msra.mxu0 0
    %281 = vmatpush.bf16.msra.mxu0 0
    %282 = vmatpush.bf16.msra.mxu0 0
    %283 = vmatpush.bf16.msra.mxu0 %v228
    %284 = vmatmul.bf16.gmra.mxu0 %v235
    %v285 = vpop.f32.mrf.mxu0
    %v286 = vadd.f32 %v210, %v285
    %v287 = vpop.f32.mrf.mxu0
    %288 = vdwg.mxu0
    %v289 = vld [vmem:[%s4] sm:$0xf]
    %v291 = vperm.slane %v289, 0
    %v292 = vperm.slane %v289, 1
    %v293 = vperm.slane %v289, 2
    %v294 = vperm.slane %v289, 3
    %v299 = vadd.f32 %v247, %v291
    %v300 = vadd.f32 %v260, %v292
    %v301 = vadd.f32 %v273, %v293
    %v302 = vadd.f32 %v286, %v294
    %v303 = vmax.f32 %v299, 0.0
    %v304 = vmax.f32 %v300, 0.0
    %v305 = vmax.f32 %v301, 0.0
    %v306 = vmax.f32 %v302, 0.0
    %v307 = vpack.c.bf16 %v303, %v303
    %v308 = vpack.c.bf16 %v304, %v304
    %v309 = vpack.c.bf16 %v305, %v305
    %v310 = vpack.c.bf16 %v306, %v306
    %v311 = vld [vmem:[#allocation10] sm:$0xff]
    %v312 = vld [vmem:[#allocation10 + $0x8] sm:$0xf]
    %v313 = vld [vmem:[#allocation10 + $0xc] sm:$0xff]
    %v314 = vld [vmem:[#allocation10 + $0x14] sm:$0xf]
    %v315 = vld [vmem:[#allocation10 + $0x18] sm:$0xff]
    %v316 = vld [vmem:[#allocation10 + $0x20] sm:$0xf]
    %v317 = vld [vmem:[#allocation10 + $0x24] sm:$0xff]
    %v318 = vld [vmem:[#allocation10 + $0x2c] sm:$0xf]
    %v319 = vld [vmem:[#allocation10 + $0x30] sm:$0xff]
    %v320 = vld [vmem:[#allocation10 + $0x38] sm:$0xf]
    %v321 = vld [vmem:[#allocation10 + $0x3c] sm:$0xff]
    %v322 = vld [vmem:[#allocation10 + $0x44] sm:$0xf]
    %v323 = vld [vmem:[#allocation10 + $0x48] sm:$0xff]
    %v324 = vld [vmem:[#allocation10 + $0x50] sm:$0xf]
    %v325 = vld [vmem:[#allocation10 + $0x54] sm:$0xff]
    %v326 = vld [vmem:[#allocation10 + $0x5c] sm:$0xf]
    %v327 = vld [vmem:[#allocation10 + $0x60] sm:$0xff]
    %v328 = vld [vmem:[#allocation10 + $0x68] sm:$0xf]
    %v329 = vld [vmem:[#allocation10 + $0x6c] sm:$0xff]
    %v330 = vld [vmem:[#allocation10 + $0x74] sm:$0xf]
    %v331 = vld [vmem:[#allocation10 + $0x78] sm:$0xff]
    %v332 = vld [vmem:[#allocation10 + $0x80] sm:$0xf]
    %v333 = vld [vmem:[#allocation10 + $0x84] sm:$0xff]
    %v334 = vld [vmem:[#allocation10 + $0x8c] sm:$0xf]
    %v335 = vld [vmem:[#allocation10 + $0x90] sm:$0xff]
    %v336 = vld [vmem:[#allocation10 + $0x98] sm:$0xf]
    %v337 = vld [vmem:[#allocation10 + $0x9c] sm:$0xff]
    %v338 = vld [vmem:[#allocation10 + $0xa4] sm:$0xf]
    %v339 = vld [vmem:[#allocation10 + $0xa8] sm:$0xff]
    %v340 = vld [vmem:[#allocation10 + $0xb0] sm:$0xf]
    %v341 = vld [vmem:[#allocation10 + $0xb4] sm:$0xff]
    %v342 = vld [vmem:[#allocation10 + $0xbc] sm:$0xf]
    %v343 = vld [vmem:[#allocation10 + $0xc0] sm:$0xff]
    %v344 = vld [vmem:[#allocation10 + $0xc8] sm:$0xf]
    %v345 = vld [vmem:[#allocation10 + $0xcc] sm:$0xff]
    %v346 = vld [vmem:[#allocation10 + $0xd4] sm:$0xf]
    %v347 = vld [vmem:[#allocation10 + $0xd8] sm:$0xff]
    %v348 = vld [vmem:[#allocation10 + $0xe0] sm:$0xf]
    %v349 = vld [vmem:[#allocation10 + $0xe4] sm:$0xff]
    %v350 = vld [vmem:[#allocation10 + $0xec] sm:$0xf]
    %v351 = vld [vmem:[#allocation10 + $0xf0] sm:$0xff]
    %v352 = vld [vmem:[#allocation10 + $0xf8] sm:$0xf]
    %v353 = vld [vmem:[#allocation10 + $0xfc] sm:$0xff]
    %v354 = vld [vmem:[#allocation10 + $0x104] sm:$0xf]
    %v355 = vld [vmem:[#allocation10 + $0x108] sm:$0xff]
    %v356 = vld [vmem:[#allocation10 + $0x110] sm:$0xf]
    %v357 = vld [vmem:[#allocation10 + $0x114] sm:$0xff]
    %v358 = vld [vmem:[#allocation10 + $0x11c] sm:$0xf]
    %v359 = vld [vmem:[#allocation10 + $0x120] sm:$0xff]
    %v360 = vld [vmem:[#allocation10 + $0x128] sm:$0xf]
    %v361 = vld [vmem:[#allocation10 + $0x12c] sm:$0xff]
    %v362 = vld [vmem:[#allocation10 + $0x134] sm:$0xf]
    %v363 = vld [vmem:[#allocation10 + $0x138] sm:$0xff]
    %v364 = vld [vmem:[#allocation10 + $0x140] sm:$0xf]
    %v365 = vld [vmem:[#allocation10 + $0x144] sm:$0xff]
    %v366 = vld [vmem:[#allocation10 + $0x14c] sm:$0xf]
    %v367 = vld [vmem:[#allocation10 + $0x150] sm:$0xff]
    %v368 = vld [vmem:[#allocation10 + $0x158] sm:$0xf]
    %v369 = vld [vmem:[#allocation10 + $0x15c] sm:$0xff]
    %v370 = vld [vmem:[#allocation10 + $0x164] sm:$0xf]
    %v371 = vld [vmem:[#allocation10 + $0x168] sm:$0xff]
    %v372 = vld [vmem:[#allocation10 + $0x170] sm:$0xf]
    %v373 = vld [vmem:[#allocation10 + $0x174] sm:$0xff]
    %v374 = vld [vmem:[#allocation10 + $0x17c] sm:$0xf]
    %v375 = vld [vmem:[#allocation10 + $0x180] sm:$0xff]
    %v376 = vld [vmem:[#allocation10 + $0x188] sm:$0xf]
    %v377 = vld [vmem:[#allocation10 + $0x18c] sm:$0xff]
    %v378 = vld [vmem:[#allocation10 + $0x194] sm:$0xf]
    %v379 = vld [vmem:[#allocation10 + $0x198] sm:$0xff]
    %v380 = vld [vmem:[#allocation10 + $0x1a0] sm:$0xf]
    %v381 = vld [vmem:[#allocation10 + $0x1a4] sm:$0xff]
    %v382 = vld [vmem:[#allocation10 + $0x1ac] sm:$0xf]
    %v383 = vld [vmem:[#allocation10 + $0x1b0] sm:$0xff]
    %v384 = vld [vmem:[#allocation10 + $0x1b8] sm:$0xf]
    %v385 = vld [vmem:[#allocation10 + $0x1bc] sm:$0xff]
    %v386 = vld [vmem:[#allocation10 + $0x1c4] sm:$0xf]
    %v387 = vld [vmem:[#allocation10 + $0x1c8] sm:$0xff]
    %v388 = vld [vmem:[#allocation10 + $0x1d0] sm:$0xf]
    %v389 = vld [vmem:[#allocation10 + $0x1d4] sm:$0xff]
    %v390 = vld [vmem:[#allocation10 + $0x1dc] sm:$0xf]
    %v391 = vld [vmem:[#allocation10 + $0x1e0] sm:$0xff]
    %v392 = vld [vmem:[#allocation10 + $0x1e8] sm:$0xf]
    %v393 = vld [vmem:[#allocation10 + $0x1ec] sm:$0xff]
    %v394 = vld [vmem:[#allocation10 + $0x1f4] sm:$0xf]
    %v395 = vld [vmem:[#allocation10 + $0x1f8] sm:$0xff]
    %v396 = vld [vmem:[#allocation10 + $0x200] sm:$0xf]
    %v397 = vld [vmem:[#allocation10 + $0x204] sm:$0xff]
    %v398 = vld [vmem:[#allocation10 + $0x20c] sm:$0xf]
    %v399 = vld [vmem:[#allocation10 + $0x210] sm:$0xff]
    %v400 = vld [vmem:[#allocation10 + $0x218] sm:$0xf]
    %v401 = vld [vmem:[#allocation10 + $0x21c] sm:$0xff]
    %v402 = vld [vmem:[#allocation10 + $0x224] sm:$0xf]
    %v403 = vld [vmem:[#allocation10 + $0x228] sm:$0xff]
    %v404 = vld [vmem:[#allocation10 + $0x230] sm:$0xf]
    %v405 = vld [vmem:[#allocation10 + $0x234] sm:$0xff]
    %v406 = vld [vmem:[#allocation10 + $0x23c] sm:$0xf]
    %v407 = vld [vmem:[#allocation10 + $0x240] sm:$0xff]
    %v408 = vld [vmem:[#allocation10 + $0x248] sm:$0xf]
    %v409 = vld [vmem:[#allocation10 + $0x24c] sm:$0xff]
    %v410 = vld [vmem:[#allocation10 + $0x254] sm:$0xf]
    %v411 = vld [vmem:[#allocation10 + $0x258] sm:$0xff]
    %v412 = vld [vmem:[#allocation10 + $0x260] sm:$0xf]
    %v413 = vld [vmem:[#allocation10 + $0x264] sm:$0xff]
    %v414 = vld [vmem:[#allocation10 + $0x26c] sm:$0xf]
    %v415 = vld [vmem:[#allocation10 + $0x270] sm:$0xff]
    %v416 = vld [vmem:[#allocation10 + $0x278] sm:$0xf]
    %v417 = vld [vmem:[#allocation10 + $0x27c] sm:$0xff]
    %v418 = vld [vmem:[#allocation10 + $0x284] sm:$0xf]
    %v419 = vld [vmem:[#allocation10 + $0x288] sm:$0xff]
    %v420 = vld [vmem:[#allocation10 + $0x290] sm:$0xf]
    %v421 = vld [vmem:[#allocation10 + $0x294] sm:$0xff]
    %v422 = vld [vmem:[#allocation10 + $0x29c] sm:$0xf]
    %v423 = vld [vmem:[#allocation10 + $0x2a0] sm:$0xff]
    %v424 = vld [vmem:[#allocation10 + $0x2a8] sm:$0xf]
    %v425 = vld [vmem:[#allocation10 + $0x2ac] sm:$0xff]
    %v426 = vld [vmem:[#allocation10 + $0x2b4] sm:$0xf]
    %v427 = vld [vmem:[#allocation10 + $0x2b8] sm:$0xff]
    %v428 = vld [vmem:[#allocation10 + $0x2c0] sm:$0xf]
    %v429 = vld [vmem:[#allocation10 + $0x2c4] sm:$0xff]
    %v430 = vld [vmem:[#allocation10 + $0x2cc] sm:$0xf]
    %v431 = vld [vmem:[#allocation10 + $0x2d0] sm:$0xff]
    %v432 = vld [vmem:[#allocation10 + $0x2d8] sm:$0xf]
    %v433 = vld [vmem:[#allocation10 + $0x2dc] sm:$0xff]
    %v434 = vld [vmem:[#allocation10 + $0x2e4] sm:$0xf]
    %v435 = vld [vmem:[#allocation10 + $0x2e8] sm:$0xff]
    %v436 = vld [vmem:[#allocation10 + $0x2f0] sm:$0xf]
    %v437 = vld [vmem:[#allocation10 + $0x2f4] sm:$0xff]
    %v438 = vld [vmem:[#allocation10 + $0x2fc] sm:$0xf]
    %v439 = vld [vmem:[%s6] sm:$0x7]
    %v441 = vperm.slane %v439, 0
    %v442 = vperm.slane %v439, 1
    %v443 = vperm.slane %v439, 2
    %v575 = vunpack.c.l.b16 %v311
    %v576 = vunpack.c.h.b16 %v311
    %v577 = vunpack.c.l.b16 %v312
    %v578 = vunpack.c.l.b16 %v313
    %v579 = vunpack.c.h.b16 %v313
    %v580 = vunpack.c.l.b16 %v314
    %v581 = vunpack.c.l.b16 %v315
    %v582 = vunpack.c.h.b16 %v315
    %v583 = vunpack.c.l.b16 %v316
    %v584 = vunpack.c.l.b16 %v317
    %v585 = vunpack.c.h.b16 %v317
    %v586 = vunpack.c.l.b16 %v318
    %v587 = vunpack.c.l.b16 %v319
    %v588 = vunpack.c.h.b16 %v319
    %v589 = vunpack.c.l.b16 %v320
    %v590 = vunpack.c.l.b16 %v321
    %v591 = vunpack.c.h.b16 %v321
    %v592 = vunpack.c.l.b16 %v322
    %v593 = vunpack.c.l.b16 %v323
    %v594 = vunpack.c.h.b16 %v323
    %v595 = vunpack.c.l.b16 %v324
    %v596 = vunpack.c.l.b16 %v325
    %v597 = vunpack.c.h.b16 %v325
    %v598 = vunpack.c.l.b16 %v326
    %v599 = vunpack.c.l.b16 %v327
    %v600 = vunpack.c.h.b16 %v327
    %v601 = vunpack.c.l.b16 %v328
    %v602 = vunpack.c.l.b16 %v329
    %v603 = vunpack.c.h.b16 %v329
    %v604 = vunpack.c.l.b16 %v330
    %v605 = vunpack.c.l.b16 %v331
    %v606 = vunpack.c.h.b16 %v331
    %v607 = vunpack.c.l.b16 %v332
    %v608 = vunpack.c.l.b16 %v333
    %v609 = vunpack.c.h.b16 %v333
    %v610 = vunpack.c.l.b16 %v334
    %v611 = vunpack.c.l.b16 %v335
    %v612 = vunpack.c.h.b16 %v335
    %v613 = vunpack.c.l.b16 %v336
    %v614 = vunpack.c.l.b16 %v337
    %v615 = vunpack.c.h.b16 %v337
    %v616 = vunpack.c.l.b16 %v338
    %v617 = vunpack.c.l.b16 %v339
    %v618 = vunpack.c.h.b16 %v339
    %v619 = vunpack.c.l.b16 %v340
    %v620 = vunpack.c.l.b16 %v341
    %v621 = vunpack.c.h.b16 %v341
    %v622 = vunpack.c.l.b16 %v342
    %v623 = vunpack.c.l.b16 %v343
    %v624 = vunpack.c.h.b16 %v343
    %v625 = vunpack.c.l.b16 %v344
    %v626 = vunpack.c.l.b16 %v345
    %v627 = vunpack.c.h.b16 %v345
    %v628 = vunpack.c.l.b16 %v346
    %v629 = vunpack.c.l.b16 %v347
    %v630 = vunpack.c.h.b16 %v347
    %v631 = vunpack.c.l.b16 %v348
    %v632 = vunpack.c.l.b16 %v349
    %v633 = vunpack.c.h.b16 %v349
    %v634 = vunpack.c.l.b16 %v350
    %v635 = vunpack.c.l.b16 %v351
    %v636 = vunpack.c.h.b16 %v351
    %v637 = vunpack.c.l.b16 %v352
    %v638 = vunpack.c.l.b16 %v353
    %v639 = vunpack.c.h.b16 %v353
    %v640 = vunpack.c.l.b16 %v354
    %v641 = vunpack.c.l.b16 %v355
    %v642 = vunpack.c.h.b16 %v355
    %v643 = vunpack.c.l.b16 %v356
    %v644 = vunpack.c.l.b16 %v357
    %v645 = vunpack.c.h.b16 %v357
    %v646 = vunpack.c.l.b16 %v358
    %v647 = vunpack.c.l.b16 %v359
    %v648 = vunpack.c.h.b16 %v359
    %v649 = vunpack.c.l.b16 %v360
    %v650 = vunpack.c.l.b16 %v361
    %v651 = vunpack.c.h.b16 %v361
    %v652 = vunpack.c.l.b16 %v362
    %v653 = vunpack.c.l.b16 %v363
    %v654 = vunpack.c.h.b16 %v363
    %v655 = vunpack.c.l.b16 %v364
    %v656 = vunpack.c.l.b16 %v365
    %v657 = vunpack.c.h.b16 %v365
    %v658 = vunpack.c.l.b16 %v366
    %v659 = vunpack.c.l.b16 %v367
    %v660 = vunpack.c.h.b16 %v367
    %v661 = vunpack.c.l.b16 %v368
    %v662 = vunpack.c.l.b16 %v369
    %v663 = vunpack.c.h.b16 %v369
    %v664 = vunpack.c.l.b16 %v370
    %v665 = vunpack.c.l.b16 %v371
    %v666 = vunpack.c.h.b16 %v371
    %v667 = vunpack.c.l.b16 %v372
    %v668 = vunpack.c.l.b16 %v373
    %v669 = vunpack.c.h.b16 %v373
    %v670 = vunpack.c.l.b16 %v374
    %v671 = vunpack.c.l.b16 %v375
    %v672 = vunpack.c.h.b16 %v375
    %v673 = vunpack.c.l.b16 %v376
    %v674 = vunpack.c.l.b16 %v377
    %v675 = vunpack.c.h.b16 %v377
    %v676 = vunpack.c.l.b16 %v378
    %v677 = vunpack.c.l.b16 %v379
    %v678 = vunpack.c.h.b16 %v379
    %v679 = vunpack.c.l.b16 %v380
    %v680 = vunpack.c.l.b16 %v381
    %v681 = vunpack.c.h.b16 %v381
    %v682 = vunpack.c.l.b16 %v382
    %v683 = vunpack.c.l.b16 %v383
    %v684 = vunpack.c.h.b16 %v383
    %v685 = vunpack.c.l.b16 %v384
    %v686 = vunpack.c.l.b16 %v385
    %v687 = vunpack.c.h.b16 %v385
    %v688 = vunpack.c.l.b16 %v386
    %v689 = vunpack.c.l.b16 %v387
    %v690 = vunpack.c.h.b16 %v387
    %v691 = vunpack.c.l.b16 %v388
    %v692 = vunpack.c.l.b16 %v389
    %v693 = vunpack.c.h.b16 %v389
    %v694 = vunpack.c.l.b16 %v390
    %v695 = vunpack.c.l.b16 %v391
    %v696 = vunpack.c.h.b16 %v391
    %v697 = vunpack.c.l.b16 %v392
    %v698 = vunpack.c.l.b16 %v393
    %v699 = vunpack.c.h.b16 %v393
    %v700 = vunpack.c.l.b16 %v394
    %v701 = vunpack.c.l.b16 %v395
    %v702 = vunpack.c.h.b16 %v395
    %v703 = vunpack.c.l.b16 %v396
    %v704 = vunpack.c.l.b16 %v397
    %v705 = vunpack.c.h.b16 %v397
    %v706 = vunpack.c.l.b16 %v398
    %v707 = vunpack.c.l.b16 %v399
    %v708 = vunpack.c.h.b16 %v399
    %v709 = vunpack.c.l.b16 %v400
    %v710 = vunpack.c.l.b16 %v401
    %v711 = vunpack.c.h.b16 %v401
    %v712 = vunpack.c.l.b16 %v402
    %v713 = vunpack.c.l.b16 %v403
    %v714 = vunpack.c.h.b16 %v403
    %v715 = vunpack.c.l.b16 %v404
    %v716 = vunpack.c.l.b16 %v405
    %v717 = vunpack.c.h.b16 %v405
    %v718 = vunpack.c.l.b16 %v406
    %v719 = vunpack.c.l.b16 %v407
    %v720 = vunpack.c.h.b16 %v407
    %v721 = vunpack.c.l.b16 %v408
    %v722 = vunpack.c.l.b16 %v409
    %v723 = vunpack.c.h.b16 %v409
    %v724 = vunpack.c.l.b16 %v410
    %v725 = vunpack.c.l.b16 %v411
    %v726 = vunpack.c.h.b16 %v411
    %v727 = vunpack.c.l.b16 %v412
    %v728 = vunpack.c.l.b16 %v413
    %v729 = vunpack.c.h.b16 %v413
    %v730 = vunpack.c.l.b16 %v414
    %v731 = vunpack.c.l.b16 %v415
    %v732 = vunpack.c.h.b16 %v415
    %v733 = vunpack.c.l.b16 %v416
    %v734 = vunpack.c.l.b16 %v417
    %v735 = vunpack.c.h.b16 %v417
    %v736 = vunpack.c.l.b16 %v418
    %v737 = vunpack.c.l.b16 %v419
    %v738 = vunpack.c.h.b16 %v419
    %v739 = vunpack.c.l.b16 %v420
    %v740 = vunpack.c.l.b16 %v421
    %v741 = vunpack.c.h.b16 %v421
    %v742 = vunpack.c.l.b16 %v422
    %v743 = vunpack.c.l.b16 %v423
    %v744 = vunpack.c.h.b16 %v423
    %v745 = vunpack.c.l.b16 %v424
    %v746 = vunpack.c.l.b16 %v425
    %v747 = vunpack.c.h.b16 %v425
    %v748 = vunpack.c.l.b16 %v426
    %v749 = vunpack.c.l.b16 %v427
    %v750 = vunpack.c.h.b16 %v427
    %v751 = vunpack.c.l.b16 %v428
    %v752 = vunpack.c.l.b16 %v429
    %v753 = vunpack.c.h.b16 %v429
    %v754 = vunpack.c.l.b16 %v430
    %v755 = vunpack.c.l.b16 %v431
    %v756 = vunpack.c.h.b16 %v431
    %v757 = vunpack.c.l.b16 %v432
    %v758 = vunpack.c.l.b16 %v433
    %v759 = vunpack.c.h.b16 %v433
    %v760 = vunpack.c.l.b16 %v434
    %v761 = vunpack.c.l.b16 %v435
    %v762 = vunpack.c.h.b16 %v435
    %v763 = vunpack.c.l.b16 %v436
    %v764 = vunpack.c.l.b16 %v437
    %v765 = vunpack.c.h.b16 %v437
    %v766 = vunpack.c.l.b16 %v438
    %v767 = vpack.c.b16 %v578, %v575
    %v768 = vpack.c.b16 %v579, %v576
    %v769 = vpack.c.b16 %v580, %v577
    %v770 = vpack.c.b16 %v584, %v581
    %v771 = vpack.c.b16 %v585, %v582
    %v772 = vpack.c.b16 %v586, %v583
    %v773 = vpack.c.b16 %v590, %v587
    %v774 = vpack.c.b16 %v591, %v588
    %v775 = vpack.c.b16 %v592, %v589
    %v776 = vpack.c.b16 %v596, %v593
    %v777 = vpack.c.b16 %v597, %v594
    %v778 = vpack.c.b16 %v598, %v595
    %v779 = vpack.c.b16 %v602, %v599
    %v780 = vpack.c.b16 %v603, %v600
    %v781 = vpack.c.b16 %v604, %v601
    %v782 = vpack.c.b16 %v608, %v605
    %v783 = vpack.c.b16 %v609, %v606
    %v784 = vpack.c.b16 %v610, %v607
    %v785 = vpack.c.b16 %v614, %v611
    %v786 = vpack.c.b16 %v615, %v612
    %v787 = vpack.c.b16 %v616, %v613
    %v788 = vpack.c.b16 %v620, %v617
    %v789 = vpack.c.b16 %v621, %v618
    %v790 = vpack.c.b16 %v622, %v619
    %v791 = vpack.c.b16 %v626, %v623
    %v792 = vpack.c.b16 %v627, %v624
    %v793 = vpack.c.b16 %v628, %v625
    %v794 = vpack.c.b16 %v632, %v629
    %v795 = vpack.c.b16 %v633, %v630
    %v796 = vpack.c.b16 %v634, %v631
    %v797 = vpack.c.b16 %v638, %v635
    %v798 = vpack.c.b16 %v639, %v636
    %v799 = vpack.c.b16 %v640, %v637
    %v800 = vpack.c.b16 %v644, %v641
    %v801 = vpack.c.b16 %v645, %v642
    %v802 = vpack.c.b16 %v646, %v643
    %v803 = vpack.c.b16 %v650, %v647
    %v804 = vpack.c.b16 %v651, %v648
    %v805 = vpack.c.b16 %v652, %v649
    %v806 = vpack.c.b16 %v656, %v653
    %v807 = vpack.c.b16 %v657, %v654
    %v808 = vpack.c.b16 %v658, %v655
    %v809 = vpack.c.b16 %v662, %v659
    %v810 = vpack.c.b16 %v663, %v660
    %v811 = vpack.c.b16 %v664, %v661
    %v812 = vpack.c.b16 %v668, %v665
    %v813 = vpack.c.b16 %v669, %v666
    %v814 = vpack.c.b16 %v670, %v667
    %v815 = vpack.c.b16 %v674, %v671
    %v816 = vpack.c.b16 %v675, %v672
    %v817 = vpack.c.b16 %v676, %v673
    %v818 = vpack.c.b16 %v680, %v677
    %v819 = vpack.c.b16 %v681, %v678
    %v820 = vpack.c.b16 %v682, %v679
    %v821 = vpack.c.b16 %v686, %v683
    %v822 = vpack.c.b16 %v687, %v684
    %v823 = vpack.c.b16 %v688, %v685
    %v824 = vpack.c.b16 %v692, %v689
    %v825 = vpack.c.b16 %v693, %v690
    %v826 = vpack.c.b16 %v694, %v691
    %v827 = vpack.c.b16 %v698, %v695
    %v828 = vpack.c.b16 %v699, %v696
    %v829 = vpack.c.b16 %v700, %v697
    %v830 = vpack.c.b16 %v704, %v701
    %v831 = vpack.c.b16 %v705, %v702
    %v832 = vpack.c.b16 %v706, %v703
    %v833 = vpack.c.b16 %v710, %v707
    %v834 = vpack.c.b16 %v711, %v708
    %v835 = vpack.c.b16 %v712, %v709
    %v836 = vpack.c.b16 %v716, %v713
    %v837 = vpack.c.b16 %v717, %v714
    %v838 = vpack.c.b16 %v718, %v715
    %v839 = vpack.c.b16 %v722, %v719
    %v840 = vpack.c.b16 %v723, %v720
    %v841 = vpack.c.b16 %v724, %v721
    %v842 = vpack.c.b16 %v728, %v725
    %v843 = vpack.c.b16 %v729, %v726
    %v844 = vpack.c.b16 %v730, %v727
    %v845 = vpack.c.b16 %v734, %v731
    %v846 = vpack.c.b16 %v735, %v732
    %v847 = vpack.c.b16 %v736, %v733
    %v848 = vpack.c.b16 %v740, %v737
    %v849 = vpack.c.b16 %v741, %v738
    %v850 = vpack.c.b16 %v742, %v739
    %v851 = vpack.c.b16 %v746, %v743
    %v852 = vpack.c.b16 %v747, %v744
    %v853 = vpack.c.b16 %v748, %v745
    %v854 = vpack.c.b16 %v752, %v749
    %v855 = vpack.c.b16 %v753, %v750
    %v856 = vpack.c.b16 %v754, %v751
    %v857 = vpack.c.b16 %v758, %v755
    %v858 = vpack.c.b16 %v759, %v756
    %v859 = vpack.c.b16 %v760, %v757
    %v860 = vpack.c.b16 %v764, %v761
    %v861 = vpack.c.b16 %v765, %v762
    %v862 = vpack.c.b16 %v766, %v763
    %959 = vmatpush.bf16.msra.mxu0 %v788
    %960 = vmatpush.bf16.msra.mxu0 %v785
    %961 = vmatpush.bf16.msra.mxu0 %v782
    %962 = vmatpush.bf16.msra.mxu0 %v779
    %963 = vmatpush.bf16.msra.mxu0 %v776
    %964 = vmatpush.bf16.msra.mxu0 %v773
    %965 = vmatpush.bf16.msra.mxu0 %v770
    %966 = vmatpush.bf16.msra.mxu0 %v767
    %967 = vmatmul.bf16.gmra.mxu0 %v307
    %v968 = vpop.f32.mrf.mxu0
    %v969 = vadd.f32 %v441, %v968
    %v970 = vpop.f32.mrf.mxu0
    %971 = vdwg.mxu0
    %972 = vmatpush.bf16.msra.mxu0 %v812
    %973 = vmatpush.bf16.msra.mxu0 %v809
    %974 = vmatpush.bf16.msra.mxu0 %v806
    %975 = vmatpush.bf16.msra.mxu0 %v803
    %976 = vmatpush.bf16.msra.mxu0 %v800
    %977 = vmatpush.bf16.msra.mxu0 %v797
    %978 = vmatpush.bf16.msra.mxu0 %v794
    %979 = vmatpush.bf16.msra.mxu0 %v791
    %980 = vmatmul.bf16.gmra.mxu0 %v308
    %v981 = vpop.f32.mrf.mxu0
    %v982 = vadd.f32 %v969, %v981
    %v983 = vpop.f32.mrf.mxu0
    %984 = vdwg.mxu0
    %985 = vmatpush.bf16.msra.mxu0 %v836
    %986 = vmatpush.bf16.msra.mxu0 %v833
    %987 = vmatpush.bf16.msra.mxu0 %v830
    %988 = vmatpush.bf16.msra.mxu0 %v827
    %989 = vmatpush.bf16.msra.mxu0 %v824
    %990 = vmatpush.bf16.msra.mxu0 %v821
    %991 = vmatpush.bf16.msra.mxu0 %v818
    %992 = vmatpush.bf16.msra.mxu0 %v815
    %993 = vmatmul.bf16.gmra.mxu0 %v309
    %v994 = vpop.f32.mrf.mxu0
    %v995 = vadd.f32 %v982, %v994
    %v996 = vpop.f32.mrf.mxu0
    %997 = vdwg.mxu0
    %998 = vmatpush.bf16.msra.mxu0 %v860
    %999 = vmatpush.bf16.msra.mxu0 %v857
    %1000 = vmatpush.bf16.msra.mxu0 %v854
    %1001 = vmatpush.bf16.msra.mxu0 %v851
    %1002 = vmatpush.bf16.msra.mxu0 %v848
    %1003 = vmatpush.bf16.msra.mxu0 %v845
    %1004 = vmatpush.bf16.msra.mxu0 %v842
    %1005 = vmatpush.bf16.msra.mxu0 %v839
    %1006 = vmatmul.bf16.gmra.mxu0 %v310
    %v1007 = vpop.f32.mrf.mxu0
    %v1008 = vadd.f32 %v995, %v1007
    %v1009 = vpop.f32.mrf.mxu0
    %1010 = vdwg.mxu0
    %1011 = vmatpush.bf16.msra.mxu0 %v789
    %1012 = vmatpush.bf16.msra.mxu0 %v786
    %1013 = vmatpush.bf16.msra.mxu0 %v783
    %1014 = vmatpush.bf16.msra.mxu0 %v780
    %1015 = vmatpush.bf16.msra.mxu0 %v777
    %1016 = vmatpush.bf16.msra.mxu0 %v774
    %1017 = vmatpush.bf16.msra.mxu0 %v771
    %1018 = vmatpush.bf16.msra.mxu0 %v768
    %1019 = vmatmul.bf16.gmra.mxu0 %v307
    %v1020 = vpop.f32.mrf.mxu0
    %v1021 = vadd.f32 %v442, %v1020
    %v1022 = vpop.f32.mrf.mxu0
    %1023 = vdwg.mxu0
    %1024 = vmatpush.bf16.msra.mxu0 %v813
    %1025 = vmatpush.bf16.msra.mxu0 %v810
    %1026 = vmatpush.bf16.msra.mxu0 %v807
    %1027 = vmatpush.bf16.msra.mxu0 %v804
    %1028 = vmatpush.bf16.msra.mxu0 %v801
    %1029 = vmatpush.bf16.msra.mxu0 %v798
    %1030 = vmatpush.bf16.msra.mxu0 %v795
    %1031 = vmatpush.bf16.msra.mxu0 %v792
    %1032 = vmatmul.bf16.gmra.mxu0 %v308
    %v1033 = vpop.f32.mrf.mxu0
    %v1034 = vadd.f32 %v1021, %v1033
    %v1035 = vpop.f32.mrf.mxu0
    %1036 = vdwg.mxu0
    %1037 = vmatpush.bf16.msra.mxu0 %v837
    %1038 = vmatpush.bf16.msra.mxu0 %v834
    %1039 = vmatpush.bf16.msra.mxu0 %v831
    %1040 = vmatpush.bf16.msra.mxu0 %v828
    %1041 = vmatpush.bf16.msra.mxu0 %v825
    %1042 = vmatpush.bf16.msra.mxu0 %v822
    %1043 = vmatpush.bf16.msra.mxu0 %v819
    %1044 = vmatpush.bf16.msra.mxu0 %v816
    %1045 = vmatmul.bf16.gmra.mxu0 %v309
    %v1046 = vpop.f32.mrf.mxu0
    %v1047 = vadd.f32 %v1034, %v1046
    %v1048 = vpop.f32.mrf.mxu0
    %1049 = vdwg.mxu0
    %1050 = vmatpush.bf16.msra.mxu0 %v861
    %1051 = vmatpush.bf16.msra.mxu0 %v858
    %1052 = vmatpush.bf16.msra.mxu0 %v855
    %1053 = vmatpush.bf16.msra.mxu0 %v852
    %1054 = vmatpush.bf16.msra.mxu0 %v849
    %1055 = vmatpush.bf16.msra.mxu0 %v846
    %1056 = vmatpush.bf16.msra.mxu0 %v843
    %1057 = vmatpush.bf16.msra.mxu0 %v840
    %1058 = vmatmul.bf16.gmra.mxu0 %v310
    %v1059 = vpop.f32.mrf.mxu0
    %v1060 = vadd.f32 %v1047, %v1059
    %v1061 = vpop.f32.mrf.mxu0
    %1062 = vdwg.mxu0
    %1063 = vmatpush.bf16.msra.mxu0 %v790
    %1064 = vmatpush.bf16.msra.mxu0 %v787
    %1065 = vmatpush.bf16.msra.mxu0 %v784
    %1066 = vmatpush.bf16.msra.mxu0 %v781
    %1067 = vmatpush.bf16.msra.mxu0 %v778
    %1068 = vmatpush.bf16.msra.mxu0 %v775
    %1069 = vmatpush.bf16.msra.mxu0 %v772
    %1070 = vmatpush.bf16.msra.mxu0 %v769
    %1071 = vmatmul.bf16.gmra.mxu0 %v307
    %v1072 = vpop.f32.mrf.mxu0
    %v1073 = vadd.f32 %v443, %v1072
    %v1074 = vpop.f32.mrf.mxu0
    %1075 = vdwg.mxu0
    %1076 = vmatpush.bf16.msra.mxu0 %v814
    %1077 = vmatpush.bf16.msra.mxu0 %v811
    %1078 = vmatpush.bf16.msra.mxu0 %v808
    %1079 = vmatpush.bf16.msra.mxu0 %v805
    %1080 = vmatpush.bf16.msra.mxu0 %v802
    %1081 = vmatpush.bf16.msra.mxu0 %v799
    %1082 = vmatpush.bf16.msra.mxu0 %v796
    %1083 = vmatpush.bf16.msra.mxu0 %v793
    %1084 = vmatmul.bf16.gmra.mxu0 %v308
    %v1085 = vpop.f32.mrf.mxu0
    %v1086 = vadd.f32 %v1073, %v1085
    %v1087 = vpop.f32.mrf.mxu0
    %1088 = vdwg.mxu0
    %1089 = vmatpush.bf16.msra.mxu0 %v838
    %1090 = vmatpush.bf16.msra.mxu0 %v835
    %1091 = vmatpush.bf16.msra.mxu0 %v832
    %1092 = vmatpush.bf16.msra.mxu0 %v829
    %1093 = vmatpush.bf16.msra.mxu0 %v826
    %1094 = vmatpush.bf16.msra.mxu0 %v823
    %1095 = vmatpush.bf16.msra.mxu0 %v820
    %1096 = vmatpush.bf16.msra.mxu0 %v817
    %1097 = vmatmul.bf16.gmra.mxu0 %v309
    %v1098 = vpop.f32.mrf.mxu0
    %v1099 = vadd.f32 %v1086, %v1098
    %v1100 = vpop.f32.mrf.mxu0
    %1101 = vdwg.mxu0
    %1102 = vmatpush.bf16.msra.mxu0 %v862
    %1103 = vmatpush.bf16.msra.mxu0 %v859
    %1104 = vmatpush.bf16.msra.mxu0 %v856
    %1105 = vmatpush.bf16.msra.mxu0 %v853
    %1106 = vmatpush.bf16.msra.mxu0 %v850
    %1107 = vmatpush.bf16.msra.mxu0 %v847
    %1108 = vmatpush.bf16.msra.mxu0 %v844
    %1109 = vmatpush.bf16.msra.mxu0 %v841
    %1110 = vmatmul.bf16.gmra.mxu0 %v310
    %v1111 = vpop.f32.mrf.mxu0
    %v1112 = vadd.f32 %v1099, %v1111
    %v1113 = vpop.f32.mrf.mxu0
    %1114 = vdwg.mxu0
    %v1115 = vmax.f32 %v1008, 0.0
    %v1116 = vmax.f32 %v1060, 0.0
    %v1117 = vmax.f32 %v1112, 0.0
    %v1118 = vld [vmem:[#allocation11] sm:$0x7]
    %v1120 = vperm.slane %v1118, 0
    %v1121 = vperm.slane %v1118, 1
    %v1122 = vperm.slane %v1118, 2
    %v1126 = vmul.f32 %v1115, %v1120
    %v1127 = vmul.f32 %v1116, %v1121
    %v1128 = vmul.f32 %v1117, %v1122
    %v1129 = vadd.f32 %v1126, %v1127
    %v1130 = vadd.f32 %v1129, %v1128
    %1131 = vadd.xlane.f32.xlu0 %v1130
    %v1132 = vpop.xlane.xlu0 %1131
    %s1133 = sld [smem:[#allocation2]]
    %v1134 = vstv %s1133
    %v1135 = vadd.f32 %v1132, %v1134
    %vm1136 = vcmask 7168
    %1137 = vst.msk [vmem:[#allocation13] sm:$0xff] %vm1136, %v1135
    // Predicated region
    $region62: #{critic_forward.1} parent=1 // pred_check
      _
    $region63: #{critic_forward.1} parent=1 // pred_check_branch
      %1139 = sbr.rel (0) target = $region65
    $region64: #{critic_forward.1} parent=1 // pred_region
      // Predicated region
      $region66: #{critic_forward.1} parent=64 // pred_check
        _
      $region67: #{critic_forward.1} parent=64 // pred_check_branch
        %1141 = sbr.rel (0) target = $region69
      $region68: #{critic_forward.1} parent=64 // pred_region
        // Predicated region
        $region70: #{critic_forward.1} parent=68 // pred_check
          _
        $region71: #{critic_forward.1} parent=68 // pred_check_branch
          %1143 = sbr.rel target = $region73
        $region72: #{critic_forward.1} parent=68 // pred_region
          // Predicated region
          $region85: #{critic_forward.1} parent=72 // pred_check
            _
          $region86: #{critic_forward.1} parent=72 // pred_check_branch
            %1159 = sbr.rel (0) target = $region88
          $region87: #{critic_forward.1} parent=72 // pred_region
            %s1161 = ssub.s32 4, 1
            loop: start=0, step=1, limit=1
            $region89: #{critic_forward.1} parent=87 // loop_pre_header
              _
            $region90: #{critic_forward.1} parent=87 // loop_header
              %s1163 = sphi 0, %s1167
              %p1164 = scmp.ge.s32.totalorder %s1163, 1
              %s1168 = sphi [#allocation13], [#allocation13]
              %s1169 = sphi %s9, %s9
            $region91: #{critic_forward.1} parent=87 // loop_header_branch
              %1166 = sbr.rel (%p1164) target = $region95
            $region92: #{critic_forward.1} parent=87 // loop_body
              %v1170 = vld [vmem:[%s1168] sm:%s1161]
              %1171 = vst [vmem:[%s1169] sm:%s1161] %v1170
            $region93: #{critic_forward.1} parent=87 // loop_footer
              %s1167 = sadd.s32 1, %s1163
            $region94: #{critic_forward.1} parent=87 // loop_footer_branch
              %1162 = sbr.rel target = $region90
            $region95: #{critic_forward.1} parent=87 // loop_exit
              _
          $region88: #{critic_forward.1} parent=72 // pred_fallthru
            _
        $region73: #{critic_forward.1} parent=68 // pred_fallthru
          _
        // Predicated region
        $region74: #{critic_forward.1} parent=68 // pred_check
          _
        $region75: #{critic_forward.1} parent=68 // pred_check_branch
          %1145 = sbr.rel (0) target = $region77
        $region76: #{critic_forward.1} parent=68 // pred_region
          %s1147 = ssub.s32 4, 1
          loop: start=0, step=1, limit=1
          $region78: #{critic_forward.1} parent=76 // loop_pre_header
            _
          $region79: #{critic_forward.1} parent=76 // loop_header
            %s1149 = sphi 0, %s1153
            %p1150 = scmp.ge.s32.totalorder %s1149, 1
            %s1154 = sphi [#allocation13], [#allocation13]
            %s1155 = sphi %s9, %s9
          $region80: #{critic_forward.1} parent=76 // loop_header_branch
            %1152 = sbr.rel (%p1150) target = $region84
          $region81: #{critic_forward.1} parent=76 // loop_body
            %v1156 = vld [vmem:[%s1154] sm:%s1147]
            %1157 = vst [vmem:[%s1155] sm:%s1147] %v1156
          $region82: #{critic_forward.1} parent=76 // loop_footer
            %s1153 = sadd.s32 1, %s1149
          $region83: #{critic_forward.1} parent=76 // loop_footer_branch
            %1148 = sbr.rel target = $region79
          $region84: #{critic_forward.1} parent=76 // loop_exit
            _
        $region77: #{critic_forward.1} parent=68 // pred_fallthru
          _
      $region69: #{critic_forward.1} parent=64 // pred_fallthru
        _
      %1172 = vnop
    $region65: #{critic_forward.1} parent=1 // pred_fallthru
      _
    // Predicated region
    $region96: #{critic_forward.1} parent=1 // pred_check
      _
    $region97: #{critic_forward.1} parent=1 // pred_check_branch
      %1174 = sbr.rel (0) target = $region99
    $region98: #{critic_forward.1} parent=1 // pred_region
      _
    $region99: #{critic_forward.1} parent=1 // pred_fallthru
      _
    %1175 = vsyncpa [#allocation4], 1
    %1176 = vsyncpa [#allocation6], 1
    %1177 = vsyncpa [#allocation9], 1
    %1178 = vsyncpa [#allocation12], 1

</llo_original>
